<compile_context>
chip_gen: v5e
topology: v5e:2x2
jax: 0.10.0
libtpu: 0.0.40
codegen_flags: <defaults>
</compile_context>

<pallas_src>
import math
import functools

import jax
import jax.numpy as jnp
from jax.experimental import pallas as pl
from jax.experimental.pallas import tpu as pltpu

COSINE_EPS = 1e-07
LN_EPS = 1e-5


# ----------------------------- small helpers -----------------------------

def _round_up(x, m):
    return (x + m - 1) // m * m


def _row_tiles(M, pref=512):
    """Pick an M-tile (multiple of 8, <= pref) and the padded row count it divides."""
    Mp = _round_up(M, 8)
    tm = min(pref, Mp)
    Mp = _round_up(Mp, tm)
    return Mp, tm


def _pick_div(n, pref, mult=8):
    """Largest divisor of n that is <= pref and a multiple of `mult` (fallback: n)."""
    d = (min(pref, n) // mult) * mult
    while d >= mult:
        if n % d == 0:
            return d
        d -= mult
    return n


def _pad_rows(x, Mp):
    M = x.shape[0]
    if Mp == M:
        return x
    return jnp.pad(x, ((0, Mp - M), (0, 0)))


def _parallel(n):
    return pltpu.CompilerParams(dimension_semantics=("parallel",) * n)


# ----------------------------- Pallas kernels -----------------------------

def _diff_mask_kernel(d_ref, o_ref, *, eps):
    # create_diff_mask: per-batch min/max normalisation of (ch1 - ch0)
    d = d_ref[...]
    dmax = jnp.max(d, axis=-1, keepdims=True)
    dmin = jnp.min(d, axis=-1, keepdims=True)
    o_ref[...] = (d - dmin) * pl.reciprocal(dmax - dmin + eps, approx=True)


def pl_diff_mask(diff_raw):
    B, HW = diff_raw.shape
    return pl.pallas_call(
        functools.partial(_diff_mask_kernel, eps=COSINE_EPS),
        out_shape=jax.ShapeDtypeStruct((B, HW), jnp.float32),
        grid=(1,),
        in_specs=[pl.BlockSpec((B, HW), lambda i: (0, 0))],
        out_specs=pl.BlockSpec((B, HW), lambda i: (0, 0)),
        compiler_params=pltpu.CompilerParams(dimension_semantics=("arbitrary",)),
    )(diff_raw)


def _corr_merge_kernel(kv_ref, q_ref, gate_ref, ex_ref, wa_ref, wb_ref, wc_ref, o_ref,
                       *, inv_sqrt_c, eps):
    # Fused: query self-correlation (row tile), min/max normalise, diff gating,
    # threshold, softmax, prototype aggregation, then init_merge (split-K 1x1 + ReLU).
    f_kv = kv_ref[0]                                   # (HW, C)  bf16
    f_q = q_ref[0]                                     # (tq, C)  bf16
    corr = jax.lax.dot_general(f_q, f_kv, (((1,), (1,)), ((), ())),
                               preferred_element_type=jnp.float32) * inv_sqrt_c
    cmin = jnp.min(corr, axis=-1, keepdims=True)
    cmax = jnp.max(corr, axis=-1, keepdims=True)
    corr = (corr - cmin) * pl.reciprocal(cmax - cmin + eps, approx=True)
    gate = jnp.maximum(gate_ref[0], 0.0)               # torch.clamp(diff, min=0)
    corr = corr * gate
    corr = jnp.where(corr > 0.0, corr, -10000000.0)    # F.threshold(x, 0, -1e7)
    m = jnp.max(corr, axis=-1, keepdims=True)
    e = jnp.exp(corr - m)
    p = e * pl.reciprocal(jnp.sum(e, axis=-1, keepdims=True), approx=True)
    qp = jnp.dot(p.astype(jnp.bfloat16), f_kv, preferred_element_type=jnp.float32)
    mer = (jnp.dot(f_q, wa_ref[...], preferred_element_type=jnp.float32)
           + jnp.dot(qp.astype(jnp.bfloat16), wb_ref[...],
                     preferred_element_type=jnp.float32)
           + jnp.dot(ex_ref[0].astype(jnp.bfloat16), wc_ref[...],
                     preferred_element_type=jnp.float32))
    o_ref[0] = jnp.maximum(mer, 0.0)                   # init_merge ReLU (no bias)


def pl_corr_merge(feat_bf16, gate, extra, wa, wb, wc):
    B, HW, C = feat_bf16.shape
    tq = _pick_div(HW, 128)
    return pl.pallas_call(
        functools.partial(_corr_merge_kernel, inv_sqrt_c=1.0 / math.sqrt(C),
                          eps=COSINE_EPS),
        out_shape=jax.ShapeDtypeStruct((B, HW, C), jnp.float32),
        grid=(B, HW // tq),
        in_specs=[pl.BlockSpec((1, HW, C), lambda b, q: (b, 0, 0)),   # resident KV
                  pl.BlockSpec((1, tq, C), lambda b, q: (b, q, 0)),   # row tile
                  pl.BlockSpec((1, 1, HW), lambda b, q: (b, 0, 0)),
                  pl.BlockSpec((1, tq, 3), lambda b, q: (b, q, 0)),
                  pl.BlockSpec((C, C), lambda b, q: (0, 0)),
                  pl.BlockSpec((C, C), lambda b, q: (0, 0)),
                  pl.BlockSpec((3, C), lambda b, q: (0, 0))],
        out_specs=pl.BlockSpec((1, tq, C), lambda b, q: (b, q, 0)),
        compiler_params=_parallel(2),
    )(feat_bf16, feat_bf16, gate, extra, wa, wb, wc)


def _ln_matmul_kernel(x_ref, g_ref, b_ref, w_ref, bias_ref, o_ref, *, eps):
    # Fused LayerNorm -> matmul(+bias); matmul operands bf16, accumulate f32.
    x = x_ref[...]
    mu = jnp.mean(x, axis=-1, keepdims=True)
    xc = x - mu
    var = jnp.mean(xc * xc, axis=-1, keepdims=True)
    y = xc * jax.lax.rsqrt(var + eps) * g_ref[...] + b_ref[...]
    acc = jnp.dot(y.astype(jnp.bfloat16), w_ref[...],
                  preferred_element_type=jnp.float32) + bias_ref[...]
    o_ref[...] = acc.astype(o_ref.dtype)


def pl_ln_matmul(x, gamma, beta, w, bias, out_dtype=jnp.float32, tm_pref=512):
    M, C = x.shape
    N = w.shape[1]
    Mp, tm = _row_tiles(M, tm_pref)
    out = pl.pallas_call(
        functools.partial(_ln_matmul_kernel, eps=LN_EPS),
        out_shape=jax.ShapeDtypeStruct((Mp, N), out_dtype),
        grid=(Mp // tm,),
        in_specs=[pl.BlockSpec((tm, C), lambda i: (i, 0)),
                  pl.BlockSpec((1, C), lambda i: (0, 0)),
                  pl.BlockSpec((1, C), lambda i: (0, 0)),
                  pl.BlockSpec((C, N), lambda i: (0, 0)),
                  pl.BlockSpec((1, N), lambda i: (0, 0))],
        out_specs=pl.BlockSpec((tm, N), lambda i: (i, 0)),
        compiler_params=_parallel(1),
    )(_pad_rows(x, Mp),
      gamma.reshape(1, C).astype(jnp.float32),
      beta.reshape(1, C).astype(jnp.float32),
      w, bias.reshape(1, N).astype(jnp.float32))
    return out[:M]


def _matmul_bias_res_kernel(a_ref, r_ref, w_ref, b_ref, o_ref):
    acc = jnp.dot(a_ref[...].astype(jnp.bfloat16), w_ref[...],
                  preferred_element_type=jnp.float32)
    o_ref[...] = acc + b_ref[...] + r_ref[...]


def pl_matmul_bias_res(a, res, w, bias, tm_pref=512):
    M, K = a.shape
    N = w.shape[1]
    Mp, tm = _row_tiles(M, tm_pref)
    out = pl.pallas_call(
        _matmul_bias_res_kernel,
        out_shape=jax.ShapeDtypeStruct((Mp, N), jnp.float32),
        grid=(Mp // tm,),
        in_specs=[pl.BlockSpec((tm, K), lambda i: (i, 0)),
                  pl.BlockSpec((tm, N), lambda i: (i, 0)),
                  pl.BlockSpec((K, N), lambda i: (0, 0)),
                  pl.BlockSpec((1, N), lambda i: (0, 0))],
        out_specs=pl.BlockSpec((tm, N), lambda i: (i, 0)),
        compiler_params=_parallel(1),
    )(_pad_rows(a, Mp), _pad_rows(res, Mp), w,
      bias.reshape(1, N).astype(jnp.float32))
    return out[:M]


def _ln_mlp_res_kernel(x_ref, g_ref, b_ref, w1_ref, b1_ref, w2_ref, b2_ref, o_ref, *, eps):
    # Fused LayerNorm -> fc1 -> GELU -> fc2 -> +residual.
    x = x_ref[...]
    mu = jnp.mean(x, axis=-1, keepdims=True)
    xc = x - mu
    var = jnp.mean(xc * xc, axis=-1, keepdims=True)
    y = xc * jax.lax.rsqrt(var + eps) * g_ref[...] + b_ref[...]
    h = jnp.dot(y.astype(jnp.bfloat16), w1_ref[...],
                preferred_element_type=jnp.float32) + b1_ref[...]
    # TODO(synk): PyTorch nn.GELU uses the exact erf form; tanh approximation here.
    h = jax.nn.gelu(h, approximate=True)
    o_ref[...] = x + jnp.dot(h.astype(jnp.bfloat16), w2_ref[...],
                             preferred_element_type=jnp.float32) + b2_ref[...]


def pl_ln_mlp_res(x, gamma, beta, w1, b1, w2, b2, tm_pref=512):
    M, C = x.shape
    Hd = w1.shape[1]
    Mp, tm = _row_tiles(M, tm_pref)
    out = pl.pallas_call(
        functools.partial(_ln_mlp_res_kernel, eps=LN_EPS),
        out_shape=jax.ShapeDtypeStruct((Mp, C), jnp.float32),
        grid=(Mp // tm,),
        in_specs=[pl.BlockSpec((tm, C), lambda i: (i, 0)),
                  pl.BlockSpec((1, C), lambda i: (0, 0)),
                  pl.BlockSpec((1, C), lambda i: (0, 0)),
                  pl.BlockSpec((C, Hd), lambda i: (0, 0)),
                  pl.BlockSpec((1, Hd), lambda i: (0, 0)),
                  pl.BlockSpec((Hd, C), lambda i: (0, 0)),
                  pl.BlockSpec((1, C), lambda i: (0, 0))],
        out_specs=pl.BlockSpec((tm, C), lambda i: (i, 0)),
        compiler_params=_parallel(1),
    )(_pad_rows(x, Mp),
      gamma.reshape(1, C).astype(jnp.float32),
      beta.reshape(1, C).astype(jnp.float32),
      w1, b1.reshape(1, Hd).astype(jnp.float32),
      w2, b2.reshape(1, C).astype(jnp.float32))
    return out[:M]


def _flash_attn_kernel(q_ref, k_ref, v_ref, o_ref, m_sc, l_sc, acc_sc, *, scale):
    kv = pl.program_id(2)

    @pl.when(kv == 0)
    def _():
        m_sc[...] = jnp.full(m_sc.shape, -jnp.inf, jnp.float32)
        l_sc[...] = jnp.zeros(l_sc.shape, jnp.float32)
        acc_sc[...] = jnp.zeros(acc_sc.shape, jnp.float32)

    q = q_ref[0]                                       # (tq, hd) bf16
    k = k_ref[0]                                       # (tkv, hd) bf16
    v = v_ref[0]
    s = jax.lax.dot_general(q, k, (((1,), (1,)), ((), ())),
                            preferred_element_type=jnp.float32) * scale
    m_prev = m_sc[...]
    m_new = jnp.maximum(m_prev, jnp.max(s, axis=-1, keepdims=True))
    alpha = jnp.exp(m_prev - m_new)
    p = jnp.exp(s - m_new)
    l_sc[...] = alpha * l_sc[...] + jnp.sum(p, axis=-1, keepdims=True)
    acc_sc[...] = alpha * acc_sc[...] + jnp.dot(p.astype(jnp.bfloat16), v,
                                                preferred_element_type=jnp.float32)
    m_sc[...] = m_new

    @pl.when(kv == pl.num_programs(2) - 1)
    def _():
        o_ref[0] = (acc_sc[...] * pl.reciprocal(l_sc[...], approx=True)
                    ).astype(o_ref.dtype)


def pl_flash_attention(q, k, v, scale):
    BH, T, D = q.shape
    tq = _pick_div(T, 128)
    tkv = _pick_div(T, 512)
    return pl.pallas_call(
        functools.partial(_flash_attn_kernel, scale=scale),
        out_shape=jax.ShapeDtypeStruct((BH, T, D), jnp.bfloat16),
        grid=(BH, T // tq, T // tkv),
        in_specs=[pl.BlockSpec((1, tq, D), lambda b, i, j: (b, i, 0)),
                  pl.BlockSpec((1, tkv, D), lambda b, i, j: (b, j, 0)),
                  pl.BlockSpec((1, tkv, D), lambda b, i, j: (b, j, 0))],
        out_specs=pl.BlockSpec((1, tq, D), lambda b, i, j: (b, i, 0)),
        scratch_shapes=[pltpu.VMEM((tq, 1), jnp.float32),
                        pltpu.VMEM((tq, 1), jnp.float32),
                        pltpu.VMEM((tq, D), jnp.float32)],
        compiler_params=pltpu.CompilerParams(
            dimension_semantics=("parallel", "parallel", "arbitrary")),
    )(q, k, v)


def _split_mm_relu_kernel(a_ref, e_ref, wa_ref, wb_ref, o_ref):
    # beta_conv: relu(concat([merge, extra]) @ W)  ==  relu(merge@Wa + extra@Wb)
    acc = jnp.dot(a_ref[...].astype(jnp.bfloat16), wa_ref[...],
                  preferred_element_type=jnp.float32)
    acc = acc + jnp.dot(e_ref[...].astype(jnp.bfloat16), wb_ref[...],
                        preferred_element_type=jnp.float32)
    o_ref[...] = jnp.maximum(acc, 0.0)


def pl_split_mm_relu(a, e, wa, wb, tm_pref=512):
    M, C = a.shape
    E = e.shape[1]
    N = wa.shape[1]
    Mp, tm = _row_tiles(M, tm_pref)
    out = pl.pallas_call(
        _split_mm_relu_kernel,
        out_shape=jax.ShapeDtypeStruct((Mp, N), jnp.float32),
        grid=(Mp // tm,),
        in_specs=[pl.BlockSpec((tm, C), lambda i: (i, 0)),
                  pl.BlockSpec((tm, E), lambda i: (i, 0)),
                  pl.BlockSpec((C, N), lambda i: (0, 0)),
                  pl.BlockSpec((E, N), lambda i: (0, 0))],
        out_specs=pl.BlockSpec((tm, N), lambda i: (i, 0)),
        compiler_params=_parallel(1),
    )(_pad_rows(a, Mp), _pad_rows(e, Mp), wa, wb)
    return out[:M]


def _conv3x3_accum(xp_ref, w_ref, S, HW):
    """3x3 conv via 9 shifted-tap matmuls on a zero-padded flattened token tensor."""
    col = jax.lax.broadcasted_iota(jnp.int32, (HW, 1), 0) % S
    cout = w_ref.shape[-1]
    acc = jnp.zeros((HW, cout), jnp.float32)
    for t in range(9):
        di, dj = t // 3, t % 3
        tap = xp_ref[0, pl.ds(di * S + dj, HW), :]            # (HW, Cin) bf16
        if dj == 0:
            tap = jnp.where(col != 0, tap, jnp.zeros_like(tap))
        elif dj == 2:
            tap = jnp.where(col != S - 1, tap, jnp.zeros_like(tap))
        acc = acc + jnp.dot(tap, w_ref[t], preferred_element_type=jnp.float32)
    return acc


def _conv3x3_kernel(xp_ref, w_ref, *rest, S, HW, relu, with_residual):
    if with_residual:
        res_ref, o_ref = rest
    else:
        (o_ref,) = rest
    acc = _conv3x3_accum(xp_ref, w_ref, S, HW)
    if relu:
        acc = jnp.maximum(acc, 0.0)
    if with_residual:
        acc = acc + res_ref[0]
    o_ref[0] = acc


def _pad_tokens(x_tok, S):
    # (B, HW, C) -> (B, HW + 2S + 2, C) zero padded so all 9 tap windows are in range.
    return jnp.pad(x_tok, ((0, 0), (S + 1, S + 1), (0, 0)))


def pl_conv3x3(x_tok, w9, S, residual=None, relu=True):
    B, HW, C = x_tok.shape
    Cout = w9.shape[-1]
    xp = _pad_tokens(x_tok.astype(jnp.bfloat16), S)
    P = HW + 2 * S + 2
    in_specs = [pl.BlockSpec((1, P, C), lambda b: (b, 0, 0)),
                pl.BlockSpec((9, C, Cout), lambda b: (0, 0, 0))]
    args = [xp, w9]
    if residual is not None:
        in_specs.append(pl.BlockSpec((1, HW, Cout), lambda b: (b, 0, 0)))
        args.append(residual)
    return pl.pallas_call(
        functools.partial(_conv3x3_kernel, S=S, HW=HW, relu=relu,
                          with_residual=residual is not None),
        out_shape=jax.ShapeDtypeStruct((B, HW, Cout), jnp.float32),
        grid=(B,),
        in_specs=in_specs,
        out_specs=pl.BlockSpec((1, HW, Cout), lambda b: (b, 0, 0)),
        compiler_params=_parallel(1),
    )(*args)


def _conv3x3_cls_kernel(xp_ref, w3_ref, w1_ref, b1_ref, o_ref, *, S, HW, with_diff, eps):
    # conv3x3(no bias)+ReLU -> Dropout2d(eval: identity) -> conv1x1(bias) [-> diff mask]
    h = jnp.maximum(_conv3x3_accum(xp_ref, w3_ref, S, HW), 0.0)
    logits = jnp.dot(h.astype(jnp.bfloat16), w1_ref[...],
                     preferred_element_type=jnp.float32) + b1_ref[...]
    if with_diff:
        d = logits[:, 1:2] - logits[:, 0:1]
        dmin = jnp.min(d, axis=0, keepdims=True)
        dmax = jnp.max(d, axis=0, keepdims=True)
        dm = (d - dmin) * pl.reciprocal(dmax - dmin + eps, approx=True)
        o_ref[0] = jnp.concatenate([logits, dm], axis=-1)
    else:
        o_ref[0] = logits


def pl_conv3x3_cls(x_tok, w3, w1, b1, S, with_diff):
    B, HW, C = x_tok.shape
    Cmid = w3.shape[-1]
    classes = w1.shape[-1]
    outc = classes + 1 if with_diff else classes
    xp = _pad_tokens(x_tok.astype(jnp.bfloat16), S)
    P = HW + 2 * S + 2
    return pl.pallas_call(
        functools.partial(_conv3x3_cls_kernel, S=S, HW=HW, with_diff=with_diff,
                          eps=COSINE_EPS),
        out_shape=jax.ShapeDtypeStruct((B, HW, outc), jnp.float32),
        grid=(B,),
        in_specs=[pl.BlockSpec((1, P, C), lambda b: (b, 0, 0)),
                  pl.BlockSpec((9, C, Cmid), lambda b: (0, 0, 0)),
                  pl.BlockSpec((Cmid, classes), lambda b: (0, 0)),
                  pl.BlockSpec((1, classes), lambda b: (0, 0))],
        out_specs=pl.BlockSpec((1, HW, outc), lambda b: (b, 0, 0)),
        compiler_params=_parallel(1),
    )(xp, w3, w1, b1.reshape(1, classes).astype(jnp.float32))


# ----------------------------- JAX glue -----------------------------

def bilinear_align_corners(x, out_hw):
    """F.interpolate(mode='bilinear', align_corners=True) on NCHW."""
    B, C, H, W = x.shape
    OH, OW = out_hw
    if (H, W) == (OH, OW):
        return x

    def src(in_size, out_size):
        if out_size == 1:
            return jnp.zeros((1,), jnp.float32)
        return jnp.arange(out_size, dtype=jnp.float32) * ((in_size - 1) / (out_size - 1))

    yy = src(H, OH)
    xx = src(W, OW)
    y0 = jnp.floor(yy).astype(jnp.int32)
    y1 = jnp.minimum(y0 + 1, H - 1)
    wy = (yy - y0.astype(jnp.float32))[None, None, :, None]
    x0 = jnp.floor(xx).astype(jnp.int32)
    x1 = jnp.minimum(x0 + 1, W - 1)
    wx = (xx - x0.astype(jnp.float32))[None, None, None, :]
    top = x[:, :, y0, :]
    bot = x[:, :, y1, :]

    def lerp_w(a):
        return a[:, :, :, x0] * (1.0 - wx) + a[:, :, :, x1] * wx

    return lerp_w(top) * (1.0 - wy) + lerp_w(bot) * wy


def block_forward(bp, x_tok, heads):
    """SAM ViT Block: LN -> MHSA -> residual -> LN -> MLP(GELU) -> residual."""
    # TODO(synk): window partition (window_size=14) and decomposed relative-position
    # bias of the SAM Block are omitted; global attention is used instead.
    B, HW, C = x_tok.shape
    hd = C // heads
    M = B * HW
    xf = x_tok.reshape(M, C)
    qkv = pl_ln_matmul(xf, bp["g1"], bp["b1"], bp["Wqkv"], bp["bqkv"],
                       out_dtype=jnp.bfloat16)                     # (M, 3C) bf16
    # TODO(synk): head split still uses XLA transposes; in-kernel head packing would
    # remove this HBM round trip and the hd-wide lane-starved QK^T/PV matmuls.
    qkv = qkv.reshape(B, HW, 3, heads, hd).transpose(2, 0, 3, 1, 4)
    qkv = qkv.reshape(3, B * heads, HW, hd)
    att = pl_flash_attention(qkv[0], qkv[1], qkv[2], scale=hd ** -0.5)
    att = att.reshape(B, heads, HW, hd).transpose(0, 2, 1, 3).reshape(M, C)
    x1 = pl_matmul_bias_res(att, xf, bp["Wproj"], bp["bproj"])     # attn proj + residual
    x2 = pl_ln_mlp_res(x1, bp["g2"], bp["b2"], bp["Wfc1"], bp["bfc1"],
                       bp["Wfc2"], bp["bfc2"])                     # LN + MLP + residual
    return x2.reshape(B, HW, C)


def one_model_forward(params, x, outputBam, query_feat_sam, depth, heads):
    B, _, H, W = x.shape
    _, C, S, _ = query_feat_sam.shape
    HW = S * S

    # TODO(synk): frozen BAM prior network and SAM ImageEncoderViT (checkpoint-loaded,
    # run under torch.no_grad in the reference) are supplied as external inputs.
    outputBam_bin = bilinear_align_corners(outputBam, (S, S))       # (B,2,S,S)
    bin_flat = outputBam_bin.reshape(B, 2, HW)
    diff_raw = bin_flat[:, 1, :] - bin_flat[:, 0, :]                # (B,HW)
    diff_mask = pl_diff_mask(diff_raw)                              # (B,HW)

    feat = query_feat_sam.reshape(B, C, HW).transpose(0, 2, 1)      # (B,HW,C)
    extra = jnp.concatenate([bin_flat.transpose(0, 2, 1), diff_mask[..., None]],
                            axis=-1)                                # (B,HW,3)
    # Fused self-correlation + prototype aggregation + init_merge (split-K, no concat).
    merge = pl_corr_merge(feat.astype(jnp.bfloat16), diff_raw.reshape(B, 1, HW),
                          extra, params["im_wa"], params["im_wb"], params["im_wc"])

    for d in range(depth):
        merge = block_forward(params["blocks"][d], merge, heads)
        if d < depth - 1:
            ic = params["inner_cls"][d]
            # inner_cls (conv3x3+ReLU+conv1x1) fused with create_diff_mask.
            cls_diff = pl_conv3x3_cls(merge, ic["W3"], ic["W1"], ic["b1"], S,
                                      with_diff=True)               # (B,HW,classes+1)
            bc = params["beta_conv"][d]
            merge = pl_split_mm_relu(merge.reshape(B * HW, C),
                                     cls_diff.reshape(B * HW, -1),
                                     bc["Wa"], bc["Wb"]).reshape(B, HW, C)

    qf = pl_conv3x3(merge, params["res2_w1"], S, relu=True)
    qf = pl_conv3x3(qf, params["res2_w2"], S, residual=merge, relu=True)   # res2 + merge
    out = pl_conv3x3_cls(qf, params["cls_w3"], params["cls_w1"], params["cls_b1"], S,
                         with_diff=False)                            # (B,HW,classes)
    out_nchw = out.transpose(0, 2, 1).reshape(B, -1, S, S)
    out_up = bilinear_align_corners(out_nchw, (H, W))
    # TODO(synk): training branch (CrossEntropyLoss main/aux losses) not implemented;
    # eval path of the reference returns (outputBam, out).
    return outputBam, out_up


# ----------------------------- parameters -----------------------------

def build_params(key, C, classes, depth, heads, mlp_ratio=4):
    keys = iter(jax.random.split(key, 64))

    def nrm(shape, scale=0.02):
        return (scale * jax.random.normal(next(keys), shape, jnp.float32)
                ).astype(jnp.bfloat16)

    hidden = mlp_ratio * C
    p = {
        "im_wa": nrm((C, C)), "im_wb": nrm((C, C)), "im_wc": nrm((3, C)),
        "blocks": [], "inner_cls": [], "beta_conv": [],
    }
    for _ in range(depth):
        p["blocks"].append(dict(
            g1=jnp.ones((C,), jnp.float32), b1=jnp.zeros((C,), jnp.float32),
            Wqkv=nrm((C, 3 * C)), bqkv=jnp.zeros((3 * C,), jnp.float32),
            Wproj=nrm((C, C)), bproj=jnp.zeros((C,), jnp.float32),
            g2=jnp.ones((C,), jnp.float32), b2=jnp.zeros((C,), jnp.float32),
            Wfc1=nrm((C, hidden)), bfc1=jnp.zeros((hidden,), jnp.float32),
            Wfc2=nrm((hidden, C)), bfc2=jnp.zeros((C,), jnp.float32),
        ))
    for _ in range(depth - 1):
        p["inner_cls"].append(dict(
            W3=nrm((9, C, C)),
            W1=nrm((C, classes)), b1=jnp.zeros((classes,), jnp.float32)))
        p["beta_conv"].append(dict(Wa=nrm((C, C)), Wb=nrm((classes + 1, C))))
    p["res2_w1"] = nrm((9, C, C))
    p["res2_w2"] = nrm((9, C, C))
    p["cls_w3"] = nrm((9, C, C))
    p["cls_w1"] = nrm((C, classes))
    p["cls_b1"] = jnp.zeros((classes,), jnp.float32)
    return p


# ----------------------------- main -----------------------------

if __name__ == "__main__":
    # Scaled-down shapes (reference: reduce_dim=256, sp_sz=64, heads=16, img 1024).
    B, H, W = 2, 16, 16          # query image batch / size
    C, S = 32, 8                 # reduce_dim, SAM feature spatial size
    CLASSES, DEPTH, HEADS = 2, 2, 4

    key = jax.random.PRNGKey(0)
    kx, kb, kf, kp = jax.random.split(key, 4)
    x = jax.random.normal(kx, (B, 3, H, W), jnp.float32)                 # NCHW query image
    outputBam = jax.random.normal(kb, (B, 2, H, W), jnp.float32)         # frozen BAM logits
    query_feat_sam = jax.random.normal(kf, (B, C, S, S), jnp.float32)    # frozen SAM features

    params = build_params(kp, C=C, classes=CLASSES, depth=DEPTH, heads=HEADS)

    outBam, out = one_model_forward(params, x, outputBam, query_feat_sam,
                                    depth=DEPTH, heads=HEADS)
    jax.block_until_ready(out)
    assert out.shape == (B, CLASSES, H, W), out.shape
    assert outBam.shape == (B, 2, H, W)
    print("KERNEL_OK")
</pallas_src>

<mosaic_0001>
module attributes {stable_mosaic.version = 11 : i64} {
  func.func @_diff_mask_kernel(%arg0: i32, %arg1: memref<2x64xf32, #tpu.memory_space<vmem>>, %arg2: memref<2x64xf32, #tpu.memory_space<vmem>>) attributes {dimension_semantics = [#tpu.dimension_semantics<arbitrary>], iteration_bounds = array<i64: 1>, scalar_prefetch = 0 : i64, scratch_operands = 0 : i64, tpu.core_type = #tpu.core_type<tc>, window_params = [{pipeline_mode = #tpu.pipeline_mode<synchronous>, transform_indices = @transform_0, window_bounds = array<i64: 2, 64>}, {pipeline_mode = #tpu.pipeline_mode<synchronous>, transform_indices = @transform_1, window_bounds = array<i64: 2, 64>}]} {
    %c0 = arith.constant 0 : index
    %c0_0 = arith.constant 0 : index
    %0 = vector.load %arg1[%c0, %c0_0] : memref<2x64xf32, #tpu.memory_space<vmem>>, vector<2x64xf32>
    %cst = arith.constant dense<0xFF800000> : vector<2xf32>
    %1 = vector.multi_reduction <maximumf>, %0, %cst [1] : vector<2x64xf32> to vector<2xf32>
    %2 = vector.shape_cast %1 : vector<2xf32> to vector<2x1xf32>
    %cst_1 = arith.constant dense<0x7F800000> : vector<2xf32>
    %3 = vector.multi_reduction <minimumf>, %0, %cst_1 [1] : vector<2x64xf32> to vector<2xf32>
    %4 = vector.shape_cast %3 : vector<2xf32> to vector<2x1xf32>
    %5 = vector.broadcast %4 : vector<2x1xf32> to vector<2x64xf32>
    %6 = arith.subf %0, %5 : vector<2x64xf32>
    %7 = arith.subf %2, %4 : vector<2x1xf32>
    %cst_2 = arith.constant 1.000000e-07 : f32
    %8 = vector.broadcast %cst_2 : f32 to vector<2x1xf32>
    %9 = arith.addf %7, %8 : vector<2x1xf32>
    %10 = tpu.reciprocal %9 {approx = true} : vector<2x1xf32> -> vector<2x1xf32>
    %11 = vector.broadcast %10 : vector<2x1xf32> to vector<2x64xf32>
    %12 = arith.mulf %6, %11 : vector<2x64xf32>
    %c0_3 = arith.constant 0 : index
    %c0_4 = arith.constant 0 : index
    %13 = vector.load %arg2[%c0_3, %c0_4] : memref<2x64xf32, #tpu.memory_space<vmem>>, vector<2x64xf32>
    tpu.vector_store %arg2[%c0_3, %c0_4], %12 {strides = array<i32>} : memref<2x64xf32, #tpu.memory_space<vmem>>, vector<2x64xf32>,
    return
  }
  func.func @transform_0(%arg0: i32) -> (i32, i32) {
    %c0_i32 = arith.constant 0 : i32
    %c0_i32_0 = arith.constant 0 : i32
    %c0_i32_1 = arith.constant 0 : i32
    return %c0_i32, %c0_i32_0 : i32, i32
  }
  func.func @transform_1(%arg0: i32) -> (i32, i32) {
    %c0_i32 = arith.constant 0 : i32
    %c0_i32_0 = arith.constant 0 : i32
    %c0_i32_1 = arith.constant 0 : i32
    return %c0_i32, %c0_i32_0 : i32, i32
  }
}

</mosaic_0001>

<llo_original>
// kernel: tpu_custom_call.1
$region0: #{tpu_custom_call.1}
  #allocation0 [shape = 'u32[]', space=smem, size = 0x4, offset = 0x4, fixed_abs, tag = 'smem constant byte address 0x4 - core index']
  #allocation1 [shape = 'u32[72,128]{1,0:T(1,128)}', space=vmem, size = 0x9000, scoped, tag = 'internal scratch']
  %s0 = inlined_call_operand.hbm [shape: f32[2,64], index: 0, kind: input, shape index: {}]
  %s1 = inlined_call_operand.hbm [shape: f32[2,64], index: 1, kind: output, shape index: {}]
  %s2 = sld [smem:[#allocation0]]
  $region18: #{tpu_custom_call.1} parent=0
    _
  %s4 = ssub.s32 1, %s2
  %s5 = scalar_select 0, %s4, %s2
  $region1: #{tpu_custom_call.1} parent=0
    #allocation2 [shape = 'u8[1024]{0}', space=vmem, size = 0x400, scoped, tag = 'input window, operand 0, single buffered']
    #allocation3 [shape = 's32[1]{0}', space=sflag, size = 0x4, scoped, tag = 'scoped memory for tpu_custom_call.1']
    #allocation4 [shape = 's32[1]{0}', space=sflag, size = 0x4, scoped, tag = 'scoped memory for tpu_custom_call.1']
    #allocation5 [shape = 'u8[1024]{0}', space=vmem, size = 0x400, scoped, tag = 'output window, operand 0, single buffered']
    %6 = vsyncpa [#allocation3], 0
    %7 = vsyncpa [#allocation4], 0
    // Predicated region
    $region2: #{tpu_custom_call.1} parent=1 // pred_check
      _
    $region3: #{tpu_custom_call.1} parent=1 // pred_check_branch
      %9 = sbr.rel (0) target = $region5
    $region4: #{tpu_custom_call.1} parent=1 // pred_region
      %11 = vsyncadd [#allocation3], 0
      %s13 = sshll.u32 %s0, 4
      %s14 = int_to_ptr.hbm [resolvable:$true] %s13
      %s15 = sshll.u32 [#allocation2], 4
      %s16 = int_to_ptr.vmem [resolvable:$true] %s15
      %18 = dma.hbm_to_vmem [thread:$0]  %s14, 32, %s16, [#allocation3]
    $region5: #{tpu_custom_call.1} parent=1 // pred_fallthru
      _
    // Predicated region
    $region6: #{tpu_custom_call.1} parent=1 // pred_check
      _
    $region7: #{tpu_custom_call.1} parent=1 // pred_check_branch
      %20 = sbr.rel (0) target = $region9
    $region8: #{tpu_custom_call.1} parent=1 // pred_region
      %22 = dma.done [#allocation3], 32
    $region9: #{tpu_custom_call.1} parent=1 // pred_fallthru
      _
    %v23 = vld [vmem:[#allocation2] sm:$0x3]
    %vm24 = vcmask 517120
    %v25 = vsel %vm24, %v23, -inf
    %26 = vmax.xlane.f32.xlu0 %v25
    %v27 = vpop.xlane.xlu0 %26
    %v28 = vsel %vm24, %v23, inf
    %29 = vmin.xlane.f32.xlu0 %v28
    %v30 = vpop.xlane.xlu0 %29
    %v31 = vsub.f32 %v23, %v30
    %v32 = vsub.f32 %v27, %v30
    %v33 = vadd.f32 %v32, 1e-07
    %v34 = vrcp.pop %v33
    %v35 = vmul.f32 %v31, %v34
    %36 = vst.msk [vmem:[#allocation5] sm:$0x3] %vm24, %v35
    // Predicated region
    $region10: #{tpu_custom_call.1} parent=1 // pred_check
      _
    $region11: #{tpu_custom_call.1} parent=1 // pred_check_branch
      %38 = sbr.rel (0) target = $region13
    $region12: #{tpu_custom_call.1} parent=1 // pred_region
      %40 = vsyncadd [#allocation4], 0
      %s42 = sshll.u32 [#allocation5], 4
      %s43 = int_to_ptr.vmem [resolvable:$true] %s42
      %s44 = sshll.u32 %s1, 4
      %s45 = int_to_ptr.hbm [resolvable:$true] %s44
      %47 = dma.vmem_to_hbm [thread:$0]  %s43, 32, %s45, [#allocation4]
    $region13: #{tpu_custom_call.1} parent=1 // pred_fallthru
      _
    // Predicated region
    $region14: #{tpu_custom_call.1} parent=1 // pred_check
      _
    $region15: #{tpu_custom_call.1} parent=1 // pred_check_branch
      %49 = sbr.rel (0) target = $region17
    $region16: #{tpu_custom_call.1} parent=1 // pred_region
      %51 = dma.done [#allocation4], 32
    $region17: #{tpu_custom_call.1} parent=1 // pred_fallthru
      _
    %52 = vsyncpa [#allocation3], 1
    %53 = vsyncpa [#allocation4], 1

</llo_original>
